<compile_context>
chip_gen: v6e
topology: v6e:2x2x1
jax: 0.10.0
libtpu: 0.0.40
codegen_flags: <defaults>
</compile_context>

<pallas_src>
import jax
import jax.numpy as jnp
from jax.experimental import pallas as pl
from jax.experimental.pallas import tpu as pltpu

_LANE = 128
_TARGET_BLOCK_BYTES = 4 * 1024 * 1024   # ~4 MiB per block (roofline knee is ~1-4 MiB)
_VMEM_LIMIT_BYTES = 32 * 1024 * 1024    # safe on v5e (128 MiB phys) and v7x (64 MiB phys)


def _relus01_kernel(x_ref, o_ref):
    # relu(x + 0.1) - 0.1 == max(x, -0.1): one VPU max in the input's native
    # dtype (weakly-typed scalar keeps bf16 packed on v6e/v7x).
    o_ref[...] = jnp.maximum(x_ref[...], -0.1).astype(o_ref.dtype)


def _relus01_2d(x2d: jnp.ndarray) -> jnp.ndarray:
    rows, cols = x2d.shape
    itemsize = jnp.dtype(x2d.dtype).itemsize
    # Largest row tile (multiple of 8) giving ~TARGET bytes per block.
    br = _TARGET_BLOCK_BYTES // (cols * itemsize)
    br = max(8, (br // 8) * 8)
    if br >= rows:
        br = rows  # block dim == full array dim is always a valid block shape
    grid = (pl.cdiv(rows, br),)  # partial last block handled by Pallas masking

    return pl.pallas_call(
        _relus01_kernel,
        out_shape=jax.ShapeDtypeStruct((rows, cols), x2d.dtype),
        grid=grid,
        in_specs=[pl.BlockSpec((br, cols), lambda i: (i, 0))],
        out_specs=pl.BlockSpec((br, cols), lambda i: (i, 0)),
        compiler_params=pltpu.CompilerParams(
            dimension_semantics=("parallel",),
            vmem_limit_bytes=_VMEM_LIMIT_BYTES,
        ),
    )(x2d)


def _choose_cols(n: int):
    """Widest lane-multiple divisor of n, preferring one that leaves rows >= 8
    so VMEM (8,128) tiles are fully packed."""
    best = None
    for c in (4096, 2048, 1024, 512, 256, _LANE):
        if n % c == 0:
            if best is None:
                best = c          # widest divisor (fallback if all rows < 8)
            if (n // c) >= 8:
                return c          # widest divisor that also fills sublanes
    return best


def relus01(x: jnp.ndarray) -> jnp.ndarray:
    """Apply ReLUS01 elementwise. Accepts any shape/layout (e.g. NCHW)."""
    orig_shape = x.shape
    n = x.size
    if n == 0:
        return x

    cols = _choose_cols(n)
    if cols is not None:
        # Copy-free lane-dense view: cols | n and cols % 128 == 0.
        y2d = _relus01_2d(x.reshape(n // cols, cols))
        return y2d.reshape(orig_shape)

    # Fallback (element count not a multiple of 128): pad -> run -> slice.
    # Rarely hit for denoiser activations; costs two extra HBM passes.
    pad = (-n) % (8 * _LANE)
    x_flat = jnp.pad(x.reshape(-1), (0, pad))
    y2d = _relus01_2d(x_flat.reshape(-1, 8 * _LANE))
    return y2d.reshape(-1)[:n].reshape(orig_shape)


if __name__ == "__main__":
    key = jax.random.PRNGKey(0)
    k1, k2, k3 = jax.random.split(key, 3)

    # NCHW input, small shape consistent with a denoiser activation.
    x = jax.random.normal(k1, (2, 4, 16, 16), dtype=jnp.float32)
    y = jax.block_until_ready(relus01(x))
    y_ref = jnp.maximum(x + 0.1, 0.0) - 0.1
    assert y.shape == x.shape and y.dtype == x.dtype
    assert jnp.allclose(y, y_ref, atol=1e-6), "mismatch vs reference"

    # Awkward element count (not a multiple of 128) exercises the pad path.
    x2 = jax.random.normal(k2, (3, 5, 7, 11), dtype=jnp.float32)
    y2 = jax.block_until_ready(relus01(x2))
    y2_ref = jnp.maximum(x2 + 0.1, 0.0) - 0.1
    assert jnp.allclose(y2, y2_ref, atol=1e-6), "mismatch vs reference (pad path)"

    # bf16 path stays in native dtype.
    x3 = jax.random.normal(k3, (2, 4, 32, 32), dtype=jnp.bfloat16)
    y3 = jax.block_until_ready(relus01(x3))
    y3_ref = jnp.maximum(x3 + jnp.bfloat16(0.1), jnp.bfloat16(0.0)) - jnp.bfloat16(0.1)
    assert y3.dtype == jnp.bfloat16
    assert jnp.allclose(y3.astype(jnp.float32), y3_ref.astype(jnp.float32), atol=1e-2)

    print("KERNEL_OK")
</pallas_src>

<mosaic_0001>
module attributes {stable_mosaic.version = 11 : i64} {
  func.func @_relus01_kernel(%arg0: i32, %arg1: memref<8x256xf32, #tpu.memory_space<vmem>>, %arg2: memref<8x256xf32, #tpu.memory_space<vmem>>) attributes {dimension_semantics = [#tpu.dimension_semantics<parallel>], iteration_bounds = array<i64: 1>, scalar_prefetch = 0 : i64, scratch_operands = 0 : i64, tpu.core_type = #tpu.core_type<tc>, window_params = [{transform_indices = @transform_0, window_bounds = array<i64: 8, 256>}, {transform_indices = @transform_1, window_bounds = array<i64: 8, 256>}]} {
    %c0 = arith.constant 0 : index
    %c0_0 = arith.constant 0 : index
    %0 = vector.load %arg1[%c0, %c0_0] : memref<8x256xf32, #tpu.memory_space<vmem>>, vector<8x256xf32>
    %cst = arith.constant -1.000000e-01 : f32
    %1 = vector.broadcast %cst : f32 to vector<8x256xf32>
    %2 = arith.maximumf %0, %1 : vector<8x256xf32>
    %c0_1 = arith.constant 0 : index
    %c0_2 = arith.constant 0 : index
    %3 = vector.load %arg2[%c0_1, %c0_2] : memref<8x256xf32, #tpu.memory_space<vmem>>, vector<8x256xf32>
    tpu.vector_store %arg2[%c0_1, %c0_2], %2 {strides = array<i32>} : memref<8x256xf32, #tpu.memory_space<vmem>>, vector<8x256xf32>,
    return
  }
  func.func @transform_0(%arg0: i32) -> (i32, i32) {
    %c0_i32 = arith.constant 0 : i32
    %c0_i32_0 = arith.constant 0 : i32
    return %arg0, %c0_i32 : i32, i32
  }
  func.func @transform_1(%arg0: i32) -> (i32, i32) {
    %c0_i32 = arith.constant 0 : i32
    %c0_i32_0 = arith.constant 0 : i32
    return %arg0, %c0_i32 : i32, i32
  }
}

</mosaic_0001>

<llo_original>
// kernel: tpu_custom_call.1
$region0: #{tpu_custom_call.1}
  #allocation0 [shape = 'u32[]', space=smem, size = 0x4, offset = 0x4, fixed_abs, tag = 'smem constant byte address 0x4 - core index']
  #allocation1 [shape = 'u32[144,128]{1,0:T(1,128)}', space=vmem, size = 0x12000, scoped, tag = 'internal scratch']
  %s0 = inlined_call_operand.hbm [shape: f32[8,256], index: 0, kind: input, shape index: {}]
  %s1 = inlined_call_operand.hbm [shape: f32[8,256], index: 1, kind: output, shape index: {}]
  %s2 = sld [smem:[#allocation0]]
  $region18: #{tpu_custom_call.1} parent=0
    _
  %s4 = ssub.s32 1, %s2
  %s5 = scalar_select 0, %s4, %s2
  $region1: #{tpu_custom_call.1} parent=0
    #allocation2 [shape = 'u8[8192]{0}', space=vmem, size = 0x2000, scoped, tag = 'input window, operand 0, single buffered']
    #allocation3 [shape = 's32[1]{0}', space=sflag, size = 0x4, scoped, tag = 'scoped memory for tpu_custom_call.1']
    #allocation4 [shape = 's32[1]{0}', space=sflag, size = 0x4, scoped, tag = 'scoped memory for tpu_custom_call.1']
    #allocation5 [shape = 'u8[8192]{0}', space=vmem, size = 0x2000, scoped, tag = 'output window, operand 0, single buffered']
    %6 = vsyncpa [#allocation3], 0
    %7 = vsyncpa [#allocation4], 0
    // Predicated region
    $region2: #{tpu_custom_call.1} parent=1 // pred_check
      _
    $region3: #{tpu_custom_call.1} parent=1 // pred_check_branch
      %9 = sbr.rel (0) target = $region5
    $region4: #{tpu_custom_call.1} parent=1 // pred_region
      %s11 = ssub.s32 256, 256
      %12 = vsyncadd [#allocation3], %s11
      %s14 = sshll.u32 [#allocation2], 4
      %s15 = int_to_ptr.vmem [resolvable:$true] %s14
      %17 = dma.hbm_to_vmem [thread:$0]  %s0, 256, %s15, [#allocation3]
    $region5: #{tpu_custom_call.1} parent=1 // pred_fallthru
      _
    // Predicated region
    $region6: #{tpu_custom_call.1} parent=1 // pred_check
      _
    $region7: #{tpu_custom_call.1} parent=1 // pred_check_branch
      %19 = sbr.rel (0) target = $region9
    $region8: #{tpu_custom_call.1} parent=1 // pred_region
      %20 = dma.done [#allocation3], 256
    $region9: #{tpu_custom_call.1} parent=1 // pred_fallthru
      _
    %v21 = vld [vmem:[#allocation2] sm:$0xff]
    %v22 = vld [vmem:[#allocation2 + $0x8] sm:$0xff]
    %v23 = vmax.f32 %v21, -0.1
    %v24 = vmax.f32 %v22, -0.1
    %25 = vst [vmem:[#allocation5] sm:$0xff] %v23
    %26 = vst [vmem:[#allocation5 + $0x8] sm:$0xff] %v24
    // Predicated region
    $region10: #{tpu_custom_call.1} parent=1 // pred_check
      _
    $region11: #{tpu_custom_call.1} parent=1 // pred_check_branch
      %28 = sbr.rel (0) target = $region13
    $region12: #{tpu_custom_call.1} parent=1 // pred_region
      %s30 = ssub.s32 256, 256
      %31 = vsyncadd [#allocation4], %s30
      %s33 = sshll.u32 [#allocation5], 4
      %s34 = int_to_ptr.vmem [resolvable:$true] %s33
      %36 = dma.vmem_to_hbm [thread:$0]  %s34, 256, %s1, [#allocation4]
    $region13: #{tpu_custom_call.1} parent=1 // pred_fallthru
      _
    // Predicated region
    $region14: #{tpu_custom_call.1} parent=1 // pred_check
      _
    $region15: #{tpu_custom_call.1} parent=1 // pred_check_branch
      %38 = sbr.rel (0) target = $region17
    $region16: #{tpu_custom_call.1} parent=1 // pred_region
      %39 = dma.done [#allocation4], 256
    $region17: #{tpu_custom_call.1} parent=1 // pred_fallthru
      _
    %40 = vsyncpa [#allocation3], 1
    %41 = vsyncpa [#allocation4], 1

</llo_original>
